<compile_context>
chip_gen: v6e
topology: v6e:2x2x1
jax: 0.10.0
libtpu: 0.0.40
codegen_flags: <defaults>
</compile_context>

<pallas_src>
import functools

import jax
import jax.numpy as jnp
from jax import lax
from jax.experimental import pallas as pl
from jax.experimental.pallas import tpu as pltpu

LANE = 128   # one 128-lane tile holds actor|critic hidden and the output slab


def _cdiv(a, b):
    return -(-a // b)


def _round_up(n, m):
    return ((n + m - 1) // m) * m


def _ac_fused_kernel(x_ref, wA_ref, bA_ref, wB_ref, bB_ref, wC_ref, bC_ref,
                     out_ref, *, action_dim):
    # Layer 1: fused fc1|fc4 -> one (state_dim, 128) bf16 MXU pass.
    x = x_ref[...].astype(jnp.bfloat16)                               # (bb, S)
    h1 = jnp.tanh(jnp.dot(x, wA_ref[...],
                          preferred_element_type=jnp.float32) + bA_ref[...])

    # Layer 2: block-diagonal fc2|fc5 -> one (128, 128) bf16 MXU pass.
    h2 = jnp.tanh(jnp.dot(h1.astype(jnp.bfloat16), wB_ref[...],
                          preferred_element_type=jnp.float32) + bB_ref[...])

    # Heads: block-diagonal pi|v -> lane-dense (bb, 128) slab.
    z = jnp.dot(h2.astype(jnp.bfloat16), wC_ref[...],
                preferred_element_type=jnp.float32) + bC_ref[...]

    # Softmax over actor lanes only; padded lanes masked to -inf -> exp() = 0.
    lane = lax.broadcasted_iota(jnp.int32, z.shape, 1)
    logits = jnp.where(lane < action_dim, z, -jnp.inf)
    m = jnp.max(logits, axis=-1, keepdims=True)
    e = jnp.exp(logits - m)
    denom = jnp.sum(e, axis=-1, keepdims=True)
    probs = e / denom            # exact f32 divide: rows sum to 1 at f32 precision

    # lanes [0, action_dim): probs ; lane action_dim: raw critic value ; rest 0
    out_ref[...] = jnp.where(lane == action_dim, z, probs)


def init_params(key, state_dim, action_dim, hidden_size):
    """PyTorch-style Linear init. Weights stored as (in, out), biases (1, out)."""
    def linear(k, fan_in, fan_out):
        kw, kb = jax.random.split(k)
        bound = 1.0 / jnp.sqrt(jnp.float32(fan_in))
        w = jax.random.uniform(kw, (fan_in, fan_out), jnp.float32, -bound, bound)
        b = jax.random.uniform(kb, (1, fan_out), jnp.float32, -bound, bound)
        return w, b

    keys = jax.random.split(key, 6)
    w1, b1 = linear(keys[0], state_dim, hidden_size)
    w2, b2 = linear(keys[1], hidden_size, hidden_size)
    wpi, bpi = linear(keys[2], hidden_size, action_dim)
    w4, b4 = linear(keys[3], state_dim, hidden_size)
    w5, b5 = linear(keys[4], hidden_size, hidden_size)
    wv, bv = linear(keys[5], hidden_size, 1)
    return dict(w1=w1, b1=b1, w2=w2, b2=b2, wpi=wpi, bpi=bpi,
                w4=w4, b4=b4, w5=w5, b5=b5, wv=wv, bv=bv)


def pack_params(params, state_dim, action_dim, hidden_size):
    """Build the fused, single-128-lane weight set consumed by the kernel."""
    assert 2 * hidden_size <= LANE, "actor+critic hidden must fit in 128 lanes"
    assert action_dim + 1 <= LANE, "action_dim + value lane must fit in 128 lanes"
    h = hidden_size
    f32 = jnp.float32

    # L1: (state_dim, 128) -- actor fc1 in lanes [0, h), critic fc4 in [h, 2h).
    wA = jnp.zeros((state_dim, LANE), f32)
    wA = wA.at[:, :h].set(params["w1"])
    wA = wA.at[:, h:2 * h].set(params["w4"])
    bA = jnp.zeros((1, LANE), f32)
    bA = bA.at[0, :h].set(params["b1"][0])
    bA = bA.at[0, h:2 * h].set(params["b4"][0])

    # L2: block-diagonal (128, 128) of fc2 / fc5.
    wB = jnp.zeros((LANE, LANE), f32)
    wB = wB.at[:h, :h].set(params["w2"])
    wB = wB.at[h:2 * h, h:2 * h].set(params["w5"])
    bB = jnp.zeros((1, LANE), f32)
    bB = bB.at[0, :h].set(params["b2"][0])
    bB = bB.at[0, h:2 * h].set(params["b5"][0])

    # Heads: block-diagonal (128, 128): pi -> lanes [0, ad), v -> lane ad.
    wC = jnp.zeros((LANE, LANE), f32)
    wC = wC.at[:h, :action_dim].set(params["wpi"])
    wC = wC.at[h:2 * h, action_dim].set(params["wv"][:, 0])
    bC = jnp.zeros((1, LANE), f32)
    bC = bC.at[0, :action_dim].set(params["bpi"][0])
    bC = bC.at[0, action_dim].set(params["bv"][0, 0])

    # Weights in bf16 (MXU-native everywhere); bias rows stay f32.
    bf16 = jnp.bfloat16
    return dict(wA=wA.astype(bf16), bA=bA,
                wB=wB.astype(bf16), bB=bB,
                wC=wC.astype(bf16), bC=bC)


def actor_critic_forward(x, packed, *, action_dim, block_b=512):
    """x: (B, state_dim) float32 -> (action_probs (B, action_dim), value (B, 1))."""
    B, state_dim = x.shape

    # Tile selection: minimize padding waste, amortize grid-step overhead and
    # give v7x's two TensorCores at least one tile each when B permits.
    num_tiles = max(_cdiv(B, block_b), min(2, _cdiv(B, 8)))
    bb = _round_up(_cdiv(B, num_tiles), 8)
    B_pad = num_tiles * bb

    xp = x.astype(jnp.float32)
    if B_pad != B:
        xp = jnp.pad(xp, ((0, B_pad - B), (0, 0)))   # batch padding only

    kernel = functools.partial(_ac_fused_kernel, action_dim=action_dim)
    out = pl.pallas_call(
        kernel,
        out_shape=jax.ShapeDtypeStruct((B_pad, LANE), jnp.float32),
        grid_spec=pltpu.PrefetchScalarGridSpec(
            num_scalar_prefetch=0,
            grid=(num_tiles,),
            in_specs=[
                pl.BlockSpec((bb, state_dim), lambda i: (i, 0)),    # x tile
                pl.BlockSpec((state_dim, LANE), lambda i: (0, 0)),  # wA (resident)
                pl.BlockSpec((1, LANE), lambda i: (0, 0)),          # bA
                pl.BlockSpec((LANE, LANE), lambda i: (0, 0)),       # wB (resident)
                pl.BlockSpec((1, LANE), lambda i: (0, 0)),          # bB
                pl.BlockSpec((LANE, LANE), lambda i: (0, 0)),       # wC (resident)
                pl.BlockSpec((1, LANE), lambda i: (0, 0)),          # bC
            ],
            out_specs=pl.BlockSpec((bb, LANE), lambda i: (i, 0)),
        ),
        compiler_params=pltpu.CompilerParams(
            dimension_semantics=("parallel",)),   # batch tiles shard over v7x's 2 TCs
    )(xp, packed["wA"], packed["bA"], packed["wB"], packed["bB"],
      packed["wC"], packed["bC"])

    action = out[:B, :action_dim]
    value = out[:B, action_dim:action_dim + 1]
    return action, value


def _reference_forward(x, p):
    a = jnp.tanh(x @ p["w1"] + p["b1"])
    a = jnp.tanh(a @ p["w2"] + p["b2"])
    pi = a @ p["wpi"] + p["bpi"]
    action = jax.nn.softmax(pi, axis=1)
    v = jnp.tanh(x @ p["w4"] + p["b4"])
    v = jnp.tanh(v @ p["w5"] + p["b5"])
    value = v @ p["wv"] + p["bv"]
    return action, value


if __name__ == "__main__":
    state_dim, action_dim, hidden_size = 16, 4, 32
    batch = 8

    key = jax.random.PRNGKey(0)
    k_params, k_x = jax.random.split(key)
    params = init_params(k_params, state_dim, action_dim, hidden_size)
    packed = pack_params(params, state_dim, action_dim, hidden_size)
    x = jax.random.normal(k_x, (batch, state_dim), jnp.float32)

    action, value = actor_critic_forward(x, packed, action_dim=action_dim)
    jax.block_until_ready((action, value))

    # Sanity check against a pure-JAX f32 reference.  Matmul inputs are bf16
    # (f32 accumulation / activations), so head tolerances are relaxed.
    ref_action, ref_value = _reference_forward(x, params)
    assert action.shape == (batch, action_dim) and value.shape == (batch, 1)
    assert jnp.allclose(action, ref_action, atol=2e-2), "actor head mismatch"
    assert jnp.allclose(value, ref_value, atol=2e-2), "critic head mismatch"
    # Exact f32 divide in the kernel -> normalization holds to f32 precision.
    assert jnp.allclose(jnp.sum(action, axis=1), 1.0, atol=1e-3), "softmax not normalized"

    # TODO(synk): select_action / compute_action (Categorical sampling, log_prob,
    # entropy) are host-side distribution utilities, not part of the forward kernel.
    print("KERNEL_OK")
</pallas_src>

<mosaic_0001>
module attributes {stable_mosaic.version = 11 : i64} {
  func.func @_ac_fused_kernel(%arg0: i32, %arg1: memref<8x16xf32, #tpu.memory_space<vmem>>, %arg2: memref<16x128xbf16, #tpu.memory_space<vmem>>, %arg3: memref<1x128xf32, #tpu.memory_space<vmem>>, %arg4: memref<128x128xbf16, #tpu.memory_space<vmem>>, %arg5: memref<1x128xf32, #tpu.memory_space<vmem>>, %arg6: memref<128x128xbf16, #tpu.memory_space<vmem>>, %arg7: memref<1x128xf32, #tpu.memory_space<vmem>>, %arg8: memref<8x128xf32, #tpu.memory_space<vmem>>) attributes {dimension_semantics = [#tpu.dimension_semantics<parallel>], iteration_bounds = array<i64: 1>, scalar_prefetch = 0 : i64, scratch_operands = 0 : i64, tpu.core_type = #tpu.core_type<tc>, window_params = [{transform_indices = @transform_0, window_bounds = array<i64: 8, 16>}, {pipeline_mode = #tpu.pipeline_mode<synchronous>, transform_indices = @transform_1, window_bounds = array<i64: 16, 128>}, {pipeline_mode = #tpu.pipeline_mode<synchronous>, transform_indices = @transform_2, window_bounds = array<i64: 1, 128>}, {pipeline_mode = #tpu.pipeline_mode<synchronous>, transform_indices = @transform_3, window_bounds = array<i64: 128, 128>}, {pipeline_mode = #tpu.pipeline_mode<synchronous>, transform_indices = @transform_4, window_bounds = array<i64: 1, 128>}, {pipeline_mode = #tpu.pipeline_mode<synchronous>, transform_indices = @transform_5, window_bounds = array<i64: 128, 128>}, {pipeline_mode = #tpu.pipeline_mode<synchronous>, transform_indices = @transform_6, window_bounds = array<i64: 1, 128>}, {transform_indices = @transform_7, window_bounds = array<i64: 8, 128>}]} {
    %c0 = arith.constant 0 : index
    %c0_0 = arith.constant 0 : index
    %0 = vector.load %arg1[%c0, %c0_0] : memref<8x16xf32, #tpu.memory_space<vmem>>, vector<8x16xf32>
    %1 = arith.truncf %0 : vector<8x16xf32> to vector<8x16xbf16>
    %c0_1 = arith.constant 0 : index
    %c0_2 = arith.constant 0 : index
    %2 = vector.load %arg2[%c0_1, %c0_2] : memref<16x128xbf16, #tpu.memory_space<vmem>>, vector<16x128xbf16>
    %cst = arith.constant dense<0.000000e+00> : vector<8x128xf32>
    %3 = tpu.matmul %1, %2, %cst {dimension_numbers = #tpu.dot_dimension_numbers<[1], [0], [0], [1], [0, 0, 1, 1], [], []>} : vector<8x16xbf16>, vector<16x128xbf16>, vector<8x128xf32> -> vector<8x128xf32>
    %c0_3 = arith.constant 0 : index
    %c0_4 = arith.constant 0 : index
    %4 = vector.load %arg3[%c0_3, %c0_4] : memref<1x128xf32, #tpu.memory_space<vmem>>, vector<1x128xf32>
    %5 = vector.broadcast %4 : vector<1x128xf32> to vector<8x128xf32>
    %6 = arith.addf %3, %5 : vector<8x128xf32>
    %7 = math.tanh %6 : vector<8x128xf32>
    %8 = arith.truncf %7 : vector<8x128xf32> to vector<8x128xbf16>
    %c0_5 = arith.constant 0 : index
    %c0_6 = arith.constant 0 : index
    %9 = vector.load %arg4[%c0_5, %c0_6] : memref<128x128xbf16, #tpu.memory_space<vmem>>, vector<128x128xbf16>
    %cst_7 = arith.constant dense<0.000000e+00> : vector<8x128xf32>
    %10 = tpu.matmul %8, %9, %cst_7 {dimension_numbers = #tpu.dot_dimension_numbers<[1], [0], [0], [1], [0, 0, 1, 1], [], []>} : vector<8x128xbf16>, vector<128x128xbf16>, vector<8x128xf32> -> vector<8x128xf32>
    %c0_8 = arith.constant 0 : index
    %c0_9 = arith.constant 0 : index
    %11 = vector.load %arg5[%c0_8, %c0_9] : memref<1x128xf32, #tpu.memory_space<vmem>>, vector<1x128xf32>
    %12 = vector.broadcast %11 : vector<1x128xf32> to vector<8x128xf32>
    %13 = arith.addf %10, %12 : vector<8x128xf32>
    %14 = math.tanh %13 : vector<8x128xf32>
    %15 = arith.truncf %14 : vector<8x128xf32> to vector<8x128xbf16>
    %c0_10 = arith.constant 0 : index
    %c0_11 = arith.constant 0 : index
    %16 = vector.load %arg6[%c0_10, %c0_11] : memref<128x128xbf16, #tpu.memory_space<vmem>>, vector<128x128xbf16>
    %cst_12 = arith.constant dense<0.000000e+00> : vector<8x128xf32>
    %17 = tpu.matmul %15, %16, %cst_12 {dimension_numbers = #tpu.dot_dimension_numbers<[1], [0], [0], [1], [0, 0, 1, 1], [], []>} : vector<8x128xbf16>, vector<128x128xbf16>, vector<8x128xf32> -> vector<8x128xf32>
    %c0_13 = arith.constant 0 : index
    %c0_14 = arith.constant 0 : index
    %18 = vector.load %arg7[%c0_13, %c0_14] : memref<1x128xf32, #tpu.memory_space<vmem>>, vector<1x128xf32>
    %19 = vector.broadcast %18 : vector<1x128xf32> to vector<8x128xf32>
    %20 = arith.addf %17, %19 : vector<8x128xf32>
    %21 = tpu.iota {dimensions = array<i32: 1>} : vector<8x128xi32>
    %c4_i32 = arith.constant 4 : i32
    %22 = vector.broadcast %c4_i32 : i32 to vector<8x128xi32>
    %23 = arith.cmpi slt, %21, %22 : vector<8x128xi32>
    %cst_15 = arith.constant 0xFF800000 : f32
    %24 = vector.broadcast %cst_15 : f32 to vector<8x128xf32>
    %25 = arith.select %23, %20, %24 : vector<8x128xi1>, vector<8x128xf32>
    %cst_16 = arith.constant dense<0xFF800000> : vector<8xf32>
    %26 = vector.multi_reduction <maximumf>, %25, %cst_16 [1] : vector<8x128xf32> to vector<8xf32>
    %27 = vector.shape_cast %26 : vector<8xf32> to vector<8x1xf32>
    %28 = vector.broadcast %27 : vector<8x1xf32> to vector<8x128xf32>
    %29 = arith.subf %25, %28 : vector<8x128xf32>
    %30 = math.exp %29 : vector<8x128xf32>
    %cst_17 = arith.constant dense<0.000000e+00> : vector<8xf32>
    %31 = vector.multi_reduction <add>, %30, %cst_17 [1] : vector<8x128xf32> to vector<8xf32>
    %32 = vector.shape_cast %31 : vector<8xf32> to vector<8x1xf32>
    %33 = vector.broadcast %32 : vector<8x1xf32> to vector<8x128xf32>
    %34 = arith.divf %30, %33 : vector<8x128xf32>
    %c4_i32_18 = arith.constant 4 : i32
    %35 = vector.broadcast %c4_i32_18 : i32 to vector<8x128xi32>
    %36 = arith.cmpi eq, %21, %35 : vector<8x128xi32>
    %37 = arith.select %36, %20, %34 : vector<8x128xi1>, vector<8x128xf32>
    %c0_19 = arith.constant 0 : index
    %c0_20 = arith.constant 0 : index
    %38 = vector.load %arg8[%c0_19, %c0_20] : memref<8x128xf32, #tpu.memory_space<vmem>>, vector<8x128xf32>
    tpu.vector_store %arg8[%c0_19, %c0_20], %37 {strides = array<i32>} : memref<8x128xf32, #tpu.memory_space<vmem>>, vector<8x128xf32>,
    return
  }
  func.func @transform_0(%arg0: i32) -> (i32, i32) {
    %c0_i32 = arith.constant 0 : i32
    %c0_i32_0 = arith.constant 0 : i32
    return %arg0, %c0_i32 : i32, i32
  }
  func.func @transform_1(%arg0: i32) -> (i32, i32) {
    %c0_i32 = arith.constant 0 : i32
    %c0_i32_0 = arith.constant 0 : i32
    %c0_i32_1 = arith.constant 0 : i32
    return %c0_i32, %c0_i32_0 : i32, i32
  }
  func.func @transform_2(%arg0: i32) -> (i32, i32) {
    %c0_i32 = arith.constant 0 : i32
    %c0_i32_0 = arith.constant 0 : i32
    %c0_i32_1 = arith.constant 0 : i32
    return %c0_i32, %c0_i32_0 : i32, i32
  }
  func.func @transform_3(%arg0: i32) -> (i32, i32) {
    %c0_i32 = arith.constant 0 : i32
    %c0_i32_0 = arith.constant 0 : i32
    %c0_i32_1 = arith.constant 0 : i32
    return %c0_i32, %c0_i32_0 : i32, i32
  }
  func.func @transform_4(%arg0: i32) -> (i32, i32) {
    %c0_i32 = arith.constant 0 : i32
    %c0_i32_0 = arith.constant 0 : i32
    %c0_i32_1 = arith.constant 0 : i32
    return %c0_i32, %c0_i32_0 : i32, i32
  }
  func.func @transform_5(%arg0: i32) -> (i32, i32) {
    %c0_i32 = arith.constant 0 : i32
    %c0_i32_0 = arith.constant 0 : i32
    %c0_i32_1 = arith.constant 0 : i32
    return %c0_i32, %c0_i32_0 : i32, i32
  }
  func.func @transform_6(%arg0: i32) -> (i32, i32) {
    %c0_i32 = arith.constant 0 : i32
    %c0_i32_0 = arith.constant 0 : i32
    %c0_i32_1 = arith.constant 0 : i32
    return %c0_i32, %c0_i32_0 : i32, i32
  }
  func.func @transform_7(%arg0: i32) -> (i32, i32) {
    %c0_i32 = arith.constant 0 : i32
    %c0_i32_0 = arith.constant 0 : i32
    return %arg0, %c0_i32 : i32, i32
  }
}

</mosaic_0001>

<llo_original>
// kernel: tpu_custom_call.1
$region0: #{tpu_custom_call.1}
  #allocation0 [shape = 'u32[]', space=smem, size = 0x4, offset = 0x4, fixed_abs, tag = 'smem constant byte address 0x4 - core index']
  #allocation1 [shape = 'u32[144,128]{1,0:T(1,128)}', space=vmem, size = 0x12000, scoped, tag = 'internal scratch']
  %s0 = inlined_call_operand.hbm [shape: f32[8,16], index: 0, kind: input, shape index: {}]
  %s1 = inlined_call_operand.hbm [shape: bf16[16,128], index: 1, kind: input, shape index: {}]
  %s2 = inlined_call_operand.vmem [shape: f32[1,128], index: 2, kind: input, shape index: {}]
  %s3 = inlined_call_operand.hbm [shape: bf16[128,128], index: 3, kind: input, shape index: {}]
  %s4 = inlined_call_operand.vmem [shape: f32[1,128], index: 4, kind: input, shape index: {}]
  %s5 = inlined_call_operand.hbm [shape: bf16[128,128], index: 5, kind: input, shape index: {}]
  %s6 = inlined_call_operand.vmem [shape: f32[1,128], index: 6, kind: input, shape index: {}]
  %s7 = inlined_call_operand.hbm [shape: f32[8,128], index: 7, kind: output, shape index: {}]
  %s8 = sld [smem:[#allocation0]]
  $region54: #{tpu_custom_call.1} parent=0
    _
  %s10 = ssub.s32 1, %s8
  %s11 = scalar_select 0, %s10, %s8
  $region1: #{tpu_custom_call.1} parent=0
    #allocation2 [shape = 'u8[4096]{0}', space=vmem, size = 0x1000, scoped, tag = 'input window, operand 0, single buffered']
    #allocation3 [shape = 's32[1]{0}', space=sflag, size = 0x4, scoped, tag = 'scoped memory for tpu_custom_call.1']
    #allocation4 [shape = 's32[1]{0}', space=sflag, size = 0x4, scoped, tag = 'scoped memory for tpu_custom_call.1']
    #allocation5 [shape = 'u8[4096]{0}', space=vmem, size = 0x1000, scoped, tag = 'input window, operand 1, single buffered']
    #allocation6 [shape = 's32[1]{0}', space=sflag, size = 0x4, scoped, tag = 'scoped memory for tpu_custom_call.1']
    #allocation7 [shape = 'u8[32768]{0}', space=vmem, size = 0x8000, scoped, tag = 'input window, operand 3, single buffered']
    #allocation8 [shape = 'u8[32768]{0}', space=vmem, size = 0x8000, scoped, tag = 'input window, operand 5, single buffered']
    #allocation9 [shape = 's32[1]{0}', space=sflag, size = 0x4, scoped, tag = 'scoped memory for tpu_custom_call.1']
    #allocation10 [shape = 'u8[4096]{0}', space=vmem, size = 0x1000, scoped, tag = 'output window, operand 0, single buffered']
    %12 = vsyncpa [#allocation3], 0
    %13 = vsyncpa [#allocation6], 0
    %14 = vsyncpa [#allocation9], 0
    %15 = vsyncpa [#allocation4], 0
    // Predicated region
    $region2: #{tpu_custom_call.1} parent=1 // pred_check
      _
    $region3: #{tpu_custom_call.1} parent=1 // pred_check_branch
      %17 = sbr.rel (0) target = $region5
    $region4: #{tpu_custom_call.1} parent=1 // pred_region
      %s19 = ssub.s32 128, 128
      %20 = vsyncadd [#allocation3], %s19
      %s22 = sshll.u32 [#allocation2], 4
      %s23 = int_to_ptr.vmem [resolvable:$true] %s22
      %25 = dma.hbm_to_vmem [thread:$0]  %s0, 128, %s23, [#allocation3]
    $region5: #{tpu_custom_call.1} parent=1 // pred_fallthru
      _
    // Predicated region
    $region6: #{tpu_custom_call.1} parent=1 // pred_check
      _
    $region7: #{tpu_custom_call.1} parent=1 // pred_check_branch
      %27 = sbr.rel (0) target = $region9
    $region8: #{tpu_custom_call.1} parent=1 // pred_region
      %s29 = ssub.s32 128, 128
      %30 = vsyncadd [#allocation6], %s29
      %s31 = sshll.u32 [#allocation5], 4
      %s32 = int_to_ptr.vmem [resolvable:$true] %s31
      %37 = dma.hbm_to_vmem [thread:$0]  %s1, 128, %s32, [#allocation6], 64, 64, 4
    $region9: #{tpu_custom_call.1} parent=1 // pred_fallthru
      _
    // Predicated region
    $region10: #{tpu_custom_call.1} parent=1 // pred_check
      _
    $region11: #{tpu_custom_call.1} parent=1 // pred_check_branch
      %39 = sbr.rel (0) target = $region13
    $region12: #{tpu_custom_call.1} parent=1 // pred_region
      _
    $region13: #{tpu_custom_call.1} parent=1 // pred_fallthru
      _
    // Predicated region
    $region14: #{tpu_custom_call.1} parent=1 // pred_check
      _
    $region15: #{tpu_custom_call.1} parent=1 // pred_check_branch
      %41 = sbr.rel (0) target = $region17
    $region16: #{tpu_custom_call.1} parent=1 // pred_region
      %s43 = ssub.s32 1024, 1024
      %44 = vsyncadd [#allocation6], %s43
      %s45 = sshll.u32 [#allocation7], 4
      %s46 = int_to_ptr.vmem [resolvable:$true] %s45
      %51 = dma.hbm_to_vmem [thread:$0]  %s3, 1024, %s46, [#allocation6], 64, 64, 4
    $region17: #{tpu_custom_call.1} parent=1 // pred_fallthru
      _
    // Predicated region
    $region18: #{tpu_custom_call.1} parent=1 // pred_check
      _
    $region19: #{tpu_custom_call.1} parent=1 // pred_check_branch
      %53 = sbr.rel (0) target = $region21
    $region20: #{tpu_custom_call.1} parent=1 // pred_region
      _
    $region21: #{tpu_custom_call.1} parent=1 // pred_fallthru
      _
    // Predicated region
    $region22: #{tpu_custom_call.1} parent=1 // pred_check
      _
    $region23: #{tpu_custom_call.1} parent=1 // pred_check_branch
      %55 = sbr.rel (0) target = $region25
    $region24: #{tpu_custom_call.1} parent=1 // pred_region
      %s57 = ssub.s32 1024, 1024
      %58 = vsyncadd [#allocation9], %s57
      %s59 = sshll.u32 [#allocation8], 4
      %s60 = int_to_ptr.vmem [resolvable:$true] %s59
      %65 = dma.hbm_to_vmem [thread:$0]  %s5, 1024, %s60, [#allocation9], 64, 64, 4
    $region25: #{tpu_custom_call.1} parent=1 // pred_fallthru
      _
    // Predicated region
    $region26: #{tpu_custom_call.1} parent=1 // pred_check
      _
    $region27: #{tpu_custom_call.1} parent=1 // pred_check_branch
      %67 = sbr.rel (0) target = $region29
    $region28: #{tpu_custom_call.1} parent=1 // pred_region
      _
    $region29: #{tpu_custom_call.1} parent=1 // pred_fallthru
      _
    // Predicated region
    $region30: #{tpu_custom_call.1} parent=1 // pred_check
      _
    $region31: #{tpu_custom_call.1} parent=1 // pred_check_branch
      %69 = sbr.rel (0) target = $region33
    $region32: #{tpu_custom_call.1} parent=1 // pred_region
      %70 = dma.done [#allocation3], 128
    $region33: #{tpu_custom_call.1} parent=1 // pred_fallthru
      _
    // Predicated region
    $region34: #{tpu_custom_call.1} parent=1 // pred_check
      _
    $region35: #{tpu_custom_call.1} parent=1 // pred_check_branch
      %72 = sbr.rel (0) target = $region37
    $region36: #{tpu_custom_call.1} parent=1 // pred_region
      %73 = dma.done [#allocation6], 128
    $region37: #{tpu_custom_call.1} parent=1 // pred_fallthru
      _
    // Predicated region
    $region38: #{tpu_custom_call.1} parent=1 // pred_check
      _
    $region39: #{tpu_custom_call.1} parent=1 // pred_check_branch
      %75 = sbr.rel (0) target = $region41
    $region40: #{tpu_custom_call.1} parent=1 // pred_region
      %76 = dma.done [#allocation6], 1024
    $region41: #{tpu_custom_call.1} parent=1 // pred_fallthru
      _
    // Predicated region
    $region42: #{tpu_custom_call.1} parent=1 // pred_check
      _
    $region43: #{tpu_custom_call.1} parent=1 // pred_check_branch
      %78 = sbr.rel (0) target = $region45
    $region44: #{tpu_custom_call.1} parent=1 // pred_region
      %79 = dma.done [#allocation9], 1024
    $region45: #{tpu_custom_call.1} parent=1 // pred_fallthru
      _
    %v81 = vld [vmem:[#allocation2] sm:$0xff]
    %v82 = vpack.c.bf16 %v81, %v81
    %v83 = vld [vmem:[#allocation5] sm:$0xf]
    %v84 = vld [vmem:[#allocation5 + $0x4] sm:$0xf]
    %v85 = vld [vmem:[%s2] sm:$0x1]
    %v87 = vlaneseq
    %v88 = vshrl.u32 %v87, 7
    %v89 = vsub.s32 0, %v88
    %v90 = vrot.slane %v85, %v89
    %v94 = vunpack.c.l.b16 %v83
    %v95 = vunpack.c.l.b16 %v84
    %v96 = vpack.c.b16 %v95, %v94
    %vm98 = vcmask 130048
    %v100 = vsel %vm98, %v82, 0
    %102 = vmatprep.subr.bf16.mxu0 0
    %103 = vmatpush1.bf16.msra.mxu0 0
    %104 = vmatprep.subr.bf16.mxu0 0
    %105 = vmatpush1.bf16.msra.mxu0 0
    %106 = vmatprep.subr.bf16.mxu0 0
    %107 = vmatpush1.bf16.msra.mxu0 0
    %108 = vmatprep.subr.bf16.mxu0 0
    %109 = vmatpush1.bf16.msra.mxu0 0
    %110 = vmatprep.subr.bf16.mxu0 0
    %111 = vmatpush1.bf16.msra.mxu0 0
    %112 = vmatprep.subr.bf16.mxu0 0
    %113 = vmatpush1.bf16.msra.mxu0 0
    %114 = vmatprep.subr.bf16.mxu0 0
    %115 = vmatpush1.bf16.msra.mxu0 0
    %116 = vmatprep.subr.bf16.mxu0 0
    %117 = vmatpush1.bf16.msra.mxu0 %v96
    %118 = vmatprep.subr.bf16.mxu0 0
    %119 = vmatpush2.bf16.msra.mxu0 0
    %120 = vmatprep.subr.bf16.mxu0 0
    %121 = vmatpush2.bf16.msra.mxu0 0
    %122 = vmatprep.subr.bf16.mxu0 0
    %123 = vmatpush2.bf16.msra.mxu0 0
    %124 = vmatprep.subr.bf16.mxu0 0
    %125 = vmatpush2.bf16.msra.mxu0 0
    %126 = vmatprep.subr.bf16.mxu0 0
    %127 = vmatpush2.bf16.msra.mxu0 0
    %128 = vmatprep.subr.bf16.mxu0 0
    %129 = vmatpush2.bf16.msra.mxu0 0
    %130 = vmatprep.subr.bf16.mxu0 0
    %131 = vmatpush2.bf16.msra.mxu0 0
    %132 = vmatprep.subr.bf16.mxu0 0
    %133 = vmatpush2.bf16.msra.mxu0 0
    %134 = vmatprep.mubr.bf16.mxu0 0
    %135 = vmatmul.mubr.bf16.gmra.mxu0 %v100
    %v136 = vpop.f32.mrf.mxu0
    %v137 = vadd.f32 %v90, %v136
    %v138 = vpop.f32.mrf.mxu0
    %v139 = vpop.f32.mrf.mxu0
    %v140 = vpop.f32.mrf.mxu0
    %141 = vdwg.mxu0
    %v142 = vtanh.pop %v137
    %v143 = vpack.c.bf16 %v142, %v142
    %v144 = vld [vmem:[#allocation7] sm:$0xf]
    %v145 = vld [vmem:[#allocation7 + $0x4] sm:$0xf]
    %v146 = vld [vmem:[#allocation7 + $0x8] sm:$0xf]
    %v147 = vld [vmem:[#allocation7 + $0xc] sm:$0xf]
    %v148 = vld [vmem:[#allocation7 + $0x10] sm:$0xf]
    %v149 = vld [vmem:[#allocation7 + $0x14] sm:$0xf]
    %v150 = vld [vmem:[#allocation7 + $0x18] sm:$0xf]
    %v151 = vld [vmem:[#allocation7 + $0x1c] sm:$0xf]
    %v152 = vld [vmem:[#allocation7 + $0x20] sm:$0xf]
    %v153 = vld [vmem:[#allocation7 + $0x24] sm:$0xf]
    %v154 = vld [vmem:[#allocation7 + $0x28] sm:$0xf]
    %v155 = vld [vmem:[#allocation7 + $0x2c] sm:$0xf]
    %v156 = vld [vmem:[#allocation7 + $0x30] sm:$0xf]
    %v157 = vld [vmem:[#allocation7 + $0x34] sm:$0xf]
    %v158 = vld [vmem:[#allocation7 + $0x38] sm:$0xf]
    %v159 = vld [vmem:[#allocation7 + $0x3c] sm:$0xf]
    %v160 = vld [vmem:[%s4] sm:$0x1]
    %v162 = vlaneseq
    %v163 = vshrl.u32 %v162, 7
    %v164 = vsub.s32 0, %v163
    %v165 = vrot.slane %v160, %v164
    %v183 = vunpack.c.l.b16 %v144
    %v184 = vunpack.c.l.b16 %v145
    %v185 = vunpack.c.l.b16 %v146
    %v186 = vunpack.c.l.b16 %v147
    %v187 = vunpack.c.l.b16 %v148
    %v188 = vunpack.c.l.b16 %v149
    %v189 = vunpack.c.l.b16 %v150
    %v190 = vunpack.c.l.b16 %v151
    %v191 = vunpack.c.l.b16 %v152
    %v192 = vunpack.c.l.b16 %v153
    %v193 = vunpack.c.l.b16 %v154
    %v194 = vunpack.c.l.b16 %v155
    %v195 = vunpack.c.l.b16 %v156
    %v196 = vunpack.c.l.b16 %v157
    %v197 = vunpack.c.l.b16 %v158
    %v198 = vunpack.c.l.b16 %v159
    %v199 = vpack.c.b16 %v184, %v183
    %v200 = vpack.c.b16 %v186, %v185
    %v201 = vpack.c.b16 %v188, %v187
    %v202 = vpack.c.b16 %v190, %v189
    %v203 = vpack.c.b16 %v192, %v191
    %v204 = vpack.c.b16 %v194, %v193
    %v205 = vpack.c.b16 %v196, %v195
    %v206 = vpack.c.b16 %v198, %v197
    %215 = vmatprep.subr.bf16.mxu0 0
    %216 = vmatpush1.bf16.msra.mxu0 %v206
    %217 = vmatprep.subr.bf16.mxu0 0
    %218 = vmatpush1.bf16.msra.mxu0 %v205
    %219 = vmatprep.subr.bf16.mxu0 0
    %220 = vmatpush1.bf16.msra.mxu0 %v204
    %221 = vmatprep.subr.bf16.mxu0 0
    %222 = vmatpush1.bf16.msra.mxu0 %v203
    %223 = vmatprep.subr.bf16.mxu0 0
    %224 = vmatpush1.bf16.msra.mxu0 %v202
    %225 = vmatprep.subr.bf16.mxu0 0
    %226 = vmatpush1.bf16.msra.mxu0 %v201
    %227 = vmatprep.subr.bf16.mxu0 0
    %228 = vmatpush1.bf16.msra.mxu0 %v200
    %229 = vmatprep.subr.bf16.mxu0 0
    %230 = vmatpush1.bf16.msra.mxu0 %v199
    %231 = vmatprep.subr.bf16.mxu0 0
    %232 = vmatpush2.bf16.msra.mxu0 0
    %233 = vmatprep.subr.bf16.mxu0 0
    %234 = vmatpush2.bf16.msra.mxu0 0
    %235 = vmatprep.subr.bf16.mxu0 0
    %236 = vmatpush2.bf16.msra.mxu0 0
    %237 = vmatprep.subr.bf16.mxu0 0
    %238 = vmatpush2.bf16.msra.mxu0 0
    %239 = vmatprep.subr.bf16.mxu0 0
    %240 = vmatpush2.bf16.msra.mxu0 0
    %241 = vmatprep.subr.bf16.mxu0 0
    %242 = vmatpush2.bf16.msra.mxu0 0
    %243 = vmatprep.subr.bf16.mxu0 0
    %244 = vmatpush2.bf16.msra.mxu0 0
    %245 = vmatprep.subr.bf16.mxu0 0
    %246 = vmatpush2.bf16.msra.mxu0 0
    %247 = vmatprep.mubr.bf16.mxu0 0
    %248 = vmatmul.mubr.bf16.gmra.mxu0 %v143
    %v249 = vpop.f32.mrf.mxu0
    %v250 = vadd.f32 %v165, %v249
    %v251 = vpop.f32.mrf.mxu0
    %v252 = vpop.f32.mrf.mxu0
    %v253 = vpop.f32.mrf.mxu0
    %254 = vdwg.mxu0
    %v255 = vtanh.pop %v250
    %v256 = vpack.c.bf16 %v255, %v255
    %v257 = vld [vmem:[#allocation8] sm:$0xf]
    %v258 = vld [vmem:[#allocation8 + $0x4] sm:$0xf]
    %v259 = vld [vmem:[#allocation8 + $0x8] sm:$0xf]
    %v260 = vld [vmem:[#allocation8 + $0xc] sm:$0xf]
    %v261 = vld [vmem:[#allocation8 + $0x10] sm:$0xf]
    %v262 = vld [vmem:[#allocation8 + $0x14] sm:$0xf]
    %v263 = vld [vmem:[#allocation8 + $0x18] sm:$0xf]
    %v264 = vld [vmem:[#allocation8 + $0x1c] sm:$0xf]
    %v265 = vld [vmem:[#allocation8 + $0x20] sm:$0xf]
    %v266 = vld [vmem:[#allocation8 + $0x24] sm:$0xf]
    %v267 = vld [vmem:[#allocation8 + $0x28] sm:$0xf]
    %v268 = vld [vmem:[#allocation8 + $0x2c] sm:$0xf]
    %v269 = vld [vmem:[#allocation8 + $0x30] sm:$0xf]
    %v270 = vld [vmem:[#allocation8 + $0x34] sm:$0xf]
    %v271 = vld [vmem:[#allocation8 + $0x38] sm:$0xf]
    %v272 = vld [vmem:[#allocation8 + $0x3c] sm:$0xf]
    %v273 = vld [vmem:[%s6] sm:$0x1]
    %v275 = vlaneseq
    %v276 = vshrl.u32 %v275, 7
    %v277 = vsub.s32 0, %v276
    %v278 = vrot.slane %v273, %v277
    %v296 = vunpack.c.l.b16 %v257
    %v297 = vunpack.c.l.b16 %v258
    %v298 = vunpack.c.l.b16 %v259
    %v299 = vunpack.c.l.b16 %v260
    %v300 = vunpack.c.l.b16 %v261
    %v301 = vunpack.c.l.b16 %v262
    %v302 = vunpack.c.l.b16 %v263
    %v303 = vunpack.c.l.b16 %v264
    %v304 = vunpack.c.l.b16 %v265
    %v305 = vunpack.c.l.b16 %v266
    %v306 = vunpack.c.l.b16 %v267
    %v307 = vunpack.c.l.b16 %v268
    %v308 = vunpack.c.l.b16 %v269
    %v309 = vunpack.c.l.b16 %v270
    %v310 = vunpack.c.l.b16 %v271
    %v311 = vunpack.c.l.b16 %v272
    %v312 = vpack.c.b16 %v297, %v296
    %v313 = vpack.c.b16 %v299, %v298
    %v314 = vpack.c.b16 %v301, %v300
    %v315 = vpack.c.b16 %v303, %v302
    %v316 = vpack.c.b16 %v305, %v304
    %v317 = vpack.c.b16 %v307, %v306
    %v318 = vpack.c.b16 %v309, %v308
    %v319 = vpack.c.b16 %v311, %v310
    %328 = vmatprep.subr.bf16.mxu0 0
    %329 = vmatpush1.bf16.msra.mxu0 %v319
    %330 = vmatprep.subr.bf16.mxu0 0
    %331 = vmatpush1.bf16.msra.mxu0 %v318
    %332 = vmatprep.subr.bf16.mxu0 0
    %333 = vmatpush1.bf16.msra.mxu0 %v317
    %334 = vmatprep.subr.bf16.mxu0 0
    %335 = vmatpush1.bf16.msra.mxu0 %v316
    %336 = vmatprep.subr.bf16.mxu0 0
    %337 = vmatpush1.bf16.msra.mxu0 %v315
    %338 = vmatprep.subr.bf16.mxu0 0
    %339 = vmatpush1.bf16.msra.mxu0 %v314
    %340 = vmatprep.subr.bf16.mxu0 0
    %341 = vmatpush1.bf16.msra.mxu0 %v313
    %342 = vmatprep.subr.bf16.mxu0 0
    %343 = vmatpush1.bf16.msra.mxu0 %v312
    %344 = vmatprep.subr.bf16.mxu0 0
    %345 = vmatpush2.bf16.msra.mxu0 0
    %346 = vmatprep.subr.bf16.mxu0 0
    %347 = vmatpush2.bf16.msra.mxu0 0
    %348 = vmatprep.subr.bf16.mxu0 0
    %349 = vmatpush2.bf16.msra.mxu0 0
    %350 = vmatprep.subr.bf16.mxu0 0
    %351 = vmatpush2.bf16.msra.mxu0 0
    %352 = vmatprep.subr.bf16.mxu0 0
    %353 = vmatpush2.bf16.msra.mxu0 0
    %354 = vmatprep.subr.bf16.mxu0 0
    %355 = vmatpush2.bf16.msra.mxu0 0
    %356 = vmatprep.subr.bf16.mxu0 0
    %357 = vmatpush2.bf16.msra.mxu0 0
    %358 = vmatprep.subr.bf16.mxu0 0
    %359 = vmatpush2.bf16.msra.mxu0 0
    %360 = vmatprep.mubr.bf16.mxu0 0
    %361 = vmatmul.mubr.bf16.gmra.mxu0 %v256
    %v362 = vpop.f32.mrf.mxu0
    %v363 = vadd.f32 %v278, %v362
    %v364 = vpop.f32.mrf.mxu0
    %v365 = vpop.f32.mrf.mxu0
    %v366 = vpop.f32.mrf.mxu0
    %367 = vdwg.mxu0
    %v368 = vlaneseq
    %v369 = vand.u32 %v368, 127
    %vm370 = vcmp.lt.s32.totalorder %v369, 4
    %v371 = vsel %vm370, %v363, -inf
    %372 = vmax.xlane.f32.xlu0 %v371
    %v373 = vpop.xlane.xlu0 %372
    %v374 = vsub.f32 %v371, %v373
    %v375 = vmul.f32 %v374, 1.442695
    %v376 = vpow.pop %v375
    %377 = vadd.xlane.f32.xlu0 %v376
    %v378 = vpop.xlane.xlu0 %377
    %v379 = vrcp.pop %v378
    %v380 = vmul.f32 %v376, %v379
    %vm381 = vcmp.eq.s32.totalorder %v369, 4
    %v382 = vsel %vm381, %v363, %v380
    %383 = vst [vmem:[#allocation10] sm:$0xff] %v382
    // Predicated region
    $region46: #{tpu_custom_call.1} parent=1 // pred_check
      _
    $region47: #{tpu_custom_call.1} parent=1 // pred_check_branch
      %385 = sbr.rel (0) target = $region49
    $region48: #{tpu_custom_call.1} parent=1 // pred_region
      %s387 = ssub.s32 128, 128
      %388 = vsyncadd [#allocation4], %s387
      %s390 = sshll.u32 [#allocation10], 4
      %s391 = int_to_ptr.vmem [resolvable:$true] %s390
      %393 = dma.vmem_to_hbm [thread:$0]  %s391, 128, %s7, [#allocation4]
    $region49: #{tpu_custom_call.1} parent=1 // pred_fallthru
      _
    // Predicated region
    $region50: #{tpu_custom_call.1} parent=1 // pred_check
      _
    $region51: #{tpu_custom_call.1} parent=1 // pred_check_branch
      %395 = sbr.rel (0) target = $region53
    $region52: #{tpu_custom_call.1} parent=1 // pred_region
      %396 = dma.done [#allocation4], 128
    $region53: #{tpu_custom_call.1} parent=1 // pred_fallthru
      _
    %397 = vsyncpa [#allocation3], 1
    %398 = vsyncpa [#allocation6], 1
    %399 = vsyncpa [#allocation9], 1
    %400 = vsyncpa [#allocation4], 1

</llo_original>
